<compile_context>
chip_gen: v7x
topology: tpu7x:2x2x1
jax: 0.10.0
libtpu: 0.0.40
codegen_flags: <defaults>
</compile_context>

<pallas_src>
import functools

import jax
import jax.numpy as jnp
from jax import lax
from jax.experimental import pallas as pl
from jax.experimental.pallas import tpu as pltpu

_PB = 128  # lane width of each packed per-head parameter block


# ---------------------------------------------------------------------------
# small helpers (kernel-safe)
# ---------------------------------------------------------------------------
def _sigmoid_exact(x):
    return 1.0 / (1.0 + jnp.exp(-x))


def _sigmoid(x):
    # exp + approximate reciprocal both ride the (otherwise idle) EUP slot
    return pl.reciprocal(1.0 + jnp.exp(-x), approx=True)


def _softplus(x):
    # numerically stable softplus built from exp/log/abs/max only
    return jnp.maximum(x, 0.0) + jnp.log(1.0 + jnp.exp(-jnp.abs(x)))


def _roll_last(x, k):
    """jnp.roll(x, k, axis=-1). Uses the XLU rotate when the lane dim is native."""
    n = x.shape[-1]
    k = k % n
    if k == 0:
        return x
    if n % 128 == 0:
        return pltpu.roll(x, k, axis=x.ndim - 1)
    # TODO(synk): pad A to a lane multiple with correct circular wrap instead of this
    # lane-concat fallback (only hit for non-classic A != k*128 configs).
    return jnp.concatenate([x[..., n - k:], x[..., :n - k]], axis=-1)


# ---------------------------------------------------------------------------
# Pallas kernel (one batch element per grid step)
# ---------------------------------------------------------------------------
def _ntm_interface_kernel(h_ref, mem_ref, prev_att_ref, w_all_ref, b_all_ref,
                          new_mem_ref, stats_ref, *, S):
    f32 = jnp.float32

    h = h_ref[0]                    # [1, H]
    m = mem_ref[0]                  # [C, A]   (content bits in sublanes, addresses in lanes)
    prev_att = prev_att_ref[0]      # [G, A]   (read heads first, write head last)

    C, A = m.shape
    G = prev_att.shape[0]

    # ---- ONE fused projection for all read heads + write head (+ erase/add) : MXU ----
    params = jnp.dot(h, w_all_ref[...], preferred_element_type=f32) + b_all_ref[...]  # [1,(G+1)*128]

    # per-head parameter blocks are 128-lane aligned -> aligned full-vreg slices + sublane concat
    hp = jnp.concatenate([params[:, g * _PB:(g + 1) * _PB] for g in range(G)], axis=0)  # [G, 128]

    q = _sigmoid(hp[:, :C])                                  # [G, C]
    beta = _softplus(hp[:, C:C + 1]) + 1.0                   # [G, 1]
    gate = _sigmoid(hp[:, C + 1:C + 2])                      # [G, 1]
    shift_raw = hp[:, C + 2:C + 2 + S]                       # [G, S]
    gamma = _softplus(hp[:, C + 2 + S:C + 3 + S]) + 1.0      # [G, 1]

    # shift softmax (non-recurrent normalization -> approx reciprocal is fine)
    sh_m = jnp.max(shift_raw, axis=1, keepdims=True)
    sh_e = jnp.exp(shift_raw - sh_m)
    shift_sm = sh_e * pl.reciprocal(jnp.sum(sh_e, axis=1, keepdims=True), approx=True)

    # ---- content-based addressing (memory norm computed once, shared by all heads) ----
    mem_inv = lax.rsqrt(jnp.maximum(jnp.sum(m * m, axis=0, keepdims=True), 1e-24))   # [1, A]
    q_inv = lax.rsqrt(jnp.maximum(jnp.sum(q * q, axis=1, keepdims=True), 1e-24))     # [G, 1]
    dots = jnp.dot(q, m, preferred_element_type=f32)                                 # [G, A]
    sim = dots * (q_inv * beta) * mem_inv                                            # [G, A]

    # EXACT softmax: attention is recurrent state, approximation error would compound
    s_max = jnp.max(sim, axis=1, keepdims=True)
    s_exp = jnp.exp(sim - s_max)
    content_att = s_exp / jnp.sum(s_exp, axis=1, keepdims=True)                      # [G, A]

    # ---- gating + circular convolution (location addressing) + sharpening ----
    att_g = gate * content_att + (1.0 - gate) * prev_att                             # [G, A]

    half = (S - 1) // 2
    shifted = shift_sm[:, half:half + 1] * att_g           # zero-shift term
    for s in range(S):
        if s == half:
            continue
        shifted = shifted + shift_sm[:, s:s + 1] * _roll_last(att_g, half - s)

    powed = jnp.exp(gamma * jnp.log(shifted + 1e-12))                                 # [G, A]
    # EXACT L1 normalization (recurrent state)
    att = powed / jnp.maximum(jnp.sum(powed, axis=1, keepdims=True), 1e-12)           # [G, A]

    # ---- read from (previous) memory: K = A contraction on the MXU ----
    read_vecs = lax.dot_general(att, m, (((1,), (1,)), ((), ())),
                                preferred_element_type=f32)                           # [G, C]

    # ---- memory update with the write head (last head); exact sigmoid: memory persists ----
    ea = params[:, G * _PB:G * _PB + 2 * C]                                           # [1, 2C]
    erase3 = _sigmoid_exact(ea[:, :C])[:, :, None]                                    # [1, C, 1]
    add3 = _sigmoid_exact(ea[:, C:2 * C])[:, :, None]                                 # [1, C, 1]
    watt3 = att[G - 1:G, :][None]                                                     # [1, 1, A]
    new_mem_ref[...] = m[None] * (1.0 - erase3 * watt3) + add3 * watt3                # [1, C, A]

    # ---- lane-dense stats slab: [1, G, 3*A]; att / content att as unmasked aligned stores
    stats_ref[:, :, 0:A] = att[None]
    stats_ref[:, :, A:2 * A] = content_att[None]
    base = 2 * A   # 128-aligned base for the small (read_vec | gate | shift) tail
    stats_ref[:, :, base:base + C] = read_vecs[None]
    stats_ref[:, :, base + C:base + C + 1] = gate[None]
    stats_ref[:, :, base + C + 1:base + C + 1 + S] = shift_sm[None]


# ---------------------------------------------------------------------------
# wrappers
# ---------------------------------------------------------------------------
def pack_ntm_interface_params(w_read, b_read, w_write, b_write):
    """Fuse the R read-head Linears + the write-head Linear into one [H, (R+2)*128] weight.

    Column layout (each block padded to 128 lanes so the kernel's per-head split is a set
    of aligned full-vreg slices):
        [head_0 P | ... | head_{R-1} P | write-head P | erase C, add C]
    with P = C + 3 + S (query, beta, gate, shift, gamma).  Weights are pre-transposed
    [H, P] so that params = h @ W + b (== torch.nn.Linear's x @ W.T + b).
    """
    R, H, P_r = w_read.shape
    P_w = w_write.shape[1]
    C = (P_w - P_r) // 2
    P = P_r
    assert P <= _PB and 2 * C <= _PB

    def padw(w):
        return jnp.pad(w, ((0, 0), (0, _PB - w.shape[1])))

    def padb(b):
        return jnp.pad(b, (0, _PB - b.shape[0]))

    blocks = [padw(w_read[r]) for r in range(R)]
    blocks += [padw(w_write[:, :P]), padw(w_write[:, P:])]
    w_all = jnp.concatenate(blocks, axis=1)                        # [H, (R+2)*128]

    b_w = b_write.reshape(-1)
    bias = [padb(b_read[r]) for r in range(R)] + [padb(b_w[:P]), padb(b_w[P:])]
    b_all = jnp.concatenate(bias).reshape(1, -1)                   # [1, (R+2)*128]
    return w_all, b_all


def ntm_interface_forward(h, mem, prev_read_att, prev_write_att, w_all, b_all, *,
                          shift_size):
    """Single-step NTMInterface forward as one Pallas kernel invocation."""
    B, H = h.shape
    _, A, C = mem.shape
    R = prev_read_att.shape[0]
    S = shift_size
    G = R + 1
    NW = (G + 1) * _PB
    f32 = jnp.float32
    assert w_all.shape == (H, NW) and b_all.shape == (1, NW)
    assert A >= C + 1 + S, "stats tail block must fit inside one A-wide lane block"

    # TODO(synk): make [B, C, A] the canonical memory layout in the surrounding NTM model
    # so these boundary transposes disappear.
    mem_ca = jnp.transpose(mem, (0, 2, 1))                          # [B, C, A]
    h3 = h[:, None, :]                                              # [B, 1, H]
    prev_att = jnp.concatenate(
        [jnp.transpose(prev_read_att, (1, 0, 2)), prev_write_att[:, None, :]], axis=1)  # [B,G,A]

    new_mem_ca, stats = pl.pallas_call(
        functools.partial(_ntm_interface_kernel, S=S),
        grid=(B,),
        out_shape=(jax.ShapeDtypeStruct((B, C, A), f32),            # updated memory (aliased)
                   jax.ShapeDtypeStruct((B, G, 3 * A), f32)),       # packed head stats
        in_specs=[
            pl.BlockSpec((1, 1, H), lambda b: (b, 0, 0)),
            pl.BlockSpec((1, C, A), lambda b: (b, 0, 0)),
            pl.BlockSpec((1, G, A), lambda b: (b, 0, 0)),
            pl.BlockSpec((H, NW), lambda b: (0, 0)),    # weights stay VMEM-resident across b
            pl.BlockSpec((1, NW), lambda b: (0, 0)),
        ],
        out_specs=(
            pl.BlockSpec((1, C, A), lambda b: (b, 0, 0)),
            pl.BlockSpec((1, G, 3 * A), lambda b: (b, 0, 0)),
        ),
        # Memory updated in place: each per-batch block is loaded fully before the aliased
        # output block is stored, and blocks are written exactly once (no revisiting).
        input_output_aliases={1: 0},
        compiler_params=pltpu.CompilerParams(
            dimension_semantics=("parallel",),          # v7x: one batch element per TensorCore
            vmem_limit_bytes=32 * 1024 * 1024),         # explicit (v5e scoped default is 16 MiB)
    )(h3, mem_ca, prev_att, w_all, b_all)

    new_mem = jnp.transpose(new_mem_ca, (0, 2, 1))                  # back to [B, A, C]

    def split(lo, width):                                           # [B,G,w] -> [G,B,w]
        return jnp.transpose(stats[:, :, lo:lo + width], (1, 0, 2))

    att_all = split(0, A)
    sim_all = split(A, A)
    rv_all = split(2 * A, C)
    gate_all = split(2 * A + C, 1)
    shift_all = split(2 * A + C + 1, S)

    return (rv_all[:R], new_mem,
            att_all[:R], sim_all[:R], gate_all[:R], shift_all[:R],
            att_all[R], sim_all[R], gate_all[R], shift_all[R])


# ---------------------------------------------------------------------------
# pure-JAX reference (mirrors the PyTorch module) for correctness checking
# ---------------------------------------------------------------------------
def _reference_head_update(params, prev_att, mem, C, S):
    q = jax.nn.sigmoid(params[:, :C])
    beta = jax.nn.softplus(params[:, C:C + 1]) + 1.0
    gate = jax.nn.sigmoid(params[:, C + 1:C + 2])
    shift_sm = jax.nn.softmax(params[:, C + 2:C + 2 + S], axis=1)
    gamma = jax.nn.softplus(params[:, C + 2 + S:C + 3 + S]) + 1.0

    qn = q / jnp.maximum(jnp.linalg.norm(q, axis=1, keepdims=True), 1e-12)
    mn = mem / jnp.maximum(jnp.linalg.norm(mem, axis=2, keepdims=True), 1e-12)
    sim = jnp.einsum('bac,bc->ba', mn, qn, precision='highest') * beta
    content = jax.nn.softmax(sim, axis=1)

    att_g = gate * content + (1.0 - gate) * prev_att
    half = (S - 1) // 2
    shifted = sum(shift_sm[:, s:s + 1] * jnp.roll(att_g, half - s, axis=1) for s in range(S))
    p = jnp.power(shifted + 1e-12, gamma)
    att = p / jnp.maximum(jnp.sum(jnp.abs(p), axis=1, keepdims=True), 1e-12)
    return att, content, gate, shift_sm


def ntm_interface_reference(h, mem, prev_read_att, prev_write_att,
                            w_read, b_read, w_write, b_write):
    R, _, P_r = w_read.shape
    C = mem.shape[2]
    S = P_r - C - 3
    rv, ra, rs, rg, rsh = [], [], [], [], []
    for i in range(R):
        params = jnp.dot(h, w_read[i], precision='highest') + b_read[i]
        att, sim, gate, shift_sm = _reference_head_update(params, prev_read_att[i], mem, C, S)
        rv.append(jnp.einsum('ba,bac->bc', att, mem, precision='highest'))
        ra.append(att); rs.append(sim); rg.append(gate); rsh.append(shift_sm)
    wp = jnp.dot(h, w_write, precision='highest') + b_write
    w_att, w_sim, w_gate, w_shift = _reference_head_update(wp, prev_write_att, mem, C, S)
    erase = jax.nn.sigmoid(wp[:, C + 3 + S:2 * C + 3 + S])
    add = jax.nn.sigmoid(wp[:, 2 * C + 3 + S:3 * C + 3 + S])
    w3 = w_att[:, :, None]
    new_mem = mem * (1.0 - w3 * erase[:, None, :]) + w3 * add[:, None, :]
    return (jnp.stack(rv), new_mem, jnp.stack(ra), jnp.stack(rs),
            jnp.stack(rg), jnp.stack(rsh), w_att, w_sim, w_gate, w_shift)


# ---------------------------------------------------------------------------
if __name__ == "__main__":
    # hidden_state_size=32, num_content_bits=8, shift_size=3, num_read_heads=2,
    # 128 memory addresses (the classic NTM config; address axis is lane-native).
    B, H, A, C, S, R = 2, 32, 128, 8, 3, 2
    P_r = C + 1 + 1 + S + 1        # read head param count
    P_w = 3 * C + 1 + 1 + S + 1    # write head param count

    key = jax.random.PRNGKey(0)
    ks = jax.random.split(key, 6)
    h = jax.random.normal(ks[0], (B, H), jnp.float32)
    mem = jax.random.uniform(ks[1], (B, A, C), jnp.float32, minval=0.01, maxval=1.0)

    # previous attentions as produced by init_state(): one-hot at address 0
    prev_read_att = jnp.zeros((R, B, A), jnp.float32).at[:, :, 0].set(1.0)
    prev_write_att = jnp.zeros((B, A), jnp.float32).at[:, 0].set(1.0)

    # deterministic synthetic Linear parameters (pre-transposed: [H, P])
    w_read = 0.1 * jax.random.normal(ks[2], (R, H, P_r), jnp.float32)
    b_read = 0.01 * jax.random.normal(ks[3], (R, P_r), jnp.float32)
    w_write = 0.1 * jax.random.normal(ks[4], (H, P_w), jnp.float32)
    b_write = 0.01 * jax.random.normal(ks[5], (1, P_w), jnp.float32)

    refs = ntm_interface_reference(h, mem, prev_read_att, prev_write_att,
                                   w_read, b_read, w_write, b_write)

    w_all, b_all = pack_ntm_interface_params(w_read, b_read, w_write, b_write)
    outs = ntm_interface_forward(h, mem, prev_read_att, prev_write_att,
                                 w_all, b_all, shift_size=S)
    outs = jax.block_until_ready(outs)

    names = ["read_vectors", "memory", "read_att", "read_sim", "read_gate",
             "read_shift", "write_att", "write_sim", "write_gate", "write_shift"]
    # Tolerance accounts for the EUP approximate reciprocal (sigmoid / shift softmax) and
    # default TPU matmul precision; attention normalizations themselves are exact.
    for name, o, r in zip(names, outs, refs):
        assert o.shape == r.shape, (name, o.shape, r.shape)
        assert jnp.allclose(o, r, rtol=5e-2, atol=2e-3), (
            f"mismatch in {name}: max abs diff {jnp.max(jnp.abs(o - r))}")

    print("KERNEL_OK")
</pallas_src>

<mosaic_0001>
module attributes {stable_mosaic.version = 11 : i64} {
  func.func @_ntm_interface_kernel(%arg0: i32, %arg1: memref<1x1x32xf32, #tpu.memory_space<vmem>>, %arg2: memref<1x8x128xf32, #tpu.memory_space<vmem>>, %arg3: memref<1x3x128xf32, #tpu.memory_space<vmem>>, %arg4: memref<32x512xf32, #tpu.memory_space<vmem>>, %arg5: memref<1x512xf32, #tpu.memory_space<vmem>>, %arg6: memref<1x8x128xf32, #tpu.memory_space<vmem>>, %arg7: memref<1x3x384xf32, #tpu.memory_space<vmem>>) attributes {dimension_semantics = [#tpu.dimension_semantics<parallel>], iteration_bounds = array<i64: 2>, scalar_prefetch = 0 : i64, scratch_operands = 0 : i64, tpu.core_type = #tpu.core_type<tc>, window_params = [{transform_indices = @transform_0, window_bounds = array<i64: 1, 1, 32>}, {transform_indices = @transform_1, window_bounds = array<i64: 1, 8, 128>}, {transform_indices = @transform_2, window_bounds = array<i64: 1, 3, 128>}, {pipeline_mode = #tpu.pipeline_mode<synchronous>, transform_indices = @transform_3, window_bounds = array<i64: 32, 512>}, {pipeline_mode = #tpu.pipeline_mode<synchronous>, transform_indices = @transform_4, window_bounds = array<i64: 1, 512>}, {transform_indices = @transform_5, window_bounds = array<i64: 1, 8, 128>}, {transform_indices = @transform_6, window_bounds = array<i64: 1, 3, 384>}]} {
    %c0 = arith.constant 0 : index
    %c0_0 = arith.constant 0 : index
    %c0_1 = arith.constant 0 : index
    %0 = vector.load %arg1[%c0, %c0_0, %c0_1] : memref<1x1x32xf32, #tpu.memory_space<vmem>>, vector<1x1x32xf32>
    %1 = vector.shape_cast %0 : vector<1x1x32xf32> to vector<1x32xf32>
    %c0_2 = arith.constant 0 : index
    %c0_3 = arith.constant 0 : index
    %c0_4 = arith.constant 0 : index
    %2 = vector.load %arg2[%c0_2, %c0_3, %c0_4] : memref<1x8x128xf32, #tpu.memory_space<vmem>>, vector<1x8x128xf32>
    %3 = vector.shape_cast %2 : vector<1x8x128xf32> to vector<8x128xf32>
    %c0_5 = arith.constant 0 : index
    %c0_6 = arith.constant 0 : index
    %c0_7 = arith.constant 0 : index
    %4 = vector.load %arg3[%c0_5, %c0_6, %c0_7] : memref<1x3x128xf32, #tpu.memory_space<vmem>>, vector<1x3x128xf32>
    %5 = vector.shape_cast %4 : vector<1x3x128xf32> to vector<3x128xf32>
    %c0_8 = arith.constant 0 : index
    %c0_9 = arith.constant 0 : index
    %6 = vector.load %arg4[%c0_8, %c0_9] : memref<32x512xf32, #tpu.memory_space<vmem>>, vector<32x512xf32>
    %cst = arith.constant dense<0.000000e+00> : vector<1x512xf32>
    %7 = tpu.matmul %1, %6, %cst {dimension_numbers = #tpu.dot_dimension_numbers<[1], [0], [0], [1], [0, 0, 1, 1], [], []>} : vector<1x32xf32>, vector<32x512xf32>, vector<1x512xf32> -> vector<1x512xf32>
    %c0_10 = arith.constant 0 : index
    %c0_11 = arith.constant 0 : index
    %8 = vector.load %arg5[%c0_10, %c0_11] : memref<1x512xf32, #tpu.memory_space<vmem>>, vector<1x512xf32>
    %9 = arith.addf %7, %8 : vector<1x512xf32>
    %10 = vector.extract_strided_slice %9 {offsets = [0, 0], sizes = [1, 128], strides = [1, 1]} : vector<1x512xf32> to vector<1x128xf32>
    %11 = vector.extract_strided_slice %9 {offsets = [0, 128], sizes = [1, 128], strides = [1, 1]} : vector<1x512xf32> to vector<1x128xf32>
    %12 = vector.extract_strided_slice %9 {offsets = [0, 256], sizes = [1, 128], strides = [1, 1]} : vector<1x512xf32> to vector<1x128xf32>
    %13 = tpu.concatenate %10, %11, %12 in 0 : vector<1x128xf32>, vector<1x128xf32>, vector<1x128xf32> -> vector<3x128xf32>
    %14 = vector.extract_strided_slice %13 {offsets = [0, 0], sizes = [3, 8], strides = [1, 1]} : vector<3x128xf32> to vector<3x8xf32>
    %cst_12 = arith.constant 0.000000e+00 : f32
    %15 = vector.broadcast %cst_12 : f32 to vector<3x8xf32>
    %16 = arith.subf %15, %14 : vector<3x8xf32>
    %17 = math.exp %16 : vector<3x8xf32>
    %cst_13 = arith.constant 1.000000e+00 : f32
    %18 = vector.broadcast %cst_13 : f32 to vector<3x8xf32>
    %19 = arith.addf %18, %17 : vector<3x8xf32>
    %20 = tpu.reciprocal %19 {approx = true} : vector<3x8xf32> -> vector<3x8xf32>
    %21 = vector.extract_strided_slice %13 {offsets = [0, 8], sizes = [3, 1], strides = [1, 1]} : vector<3x128xf32> to vector<3x1xf32>
    %cst_14 = arith.constant 0.000000e+00 : f32
    %22 = vector.broadcast %cst_14 : f32 to vector<3x1xf32>
    %23 = arith.maximumf %21, %22 : vector<3x1xf32>
    %24 = math.absf %21 : vector<3x1xf32>
    %cst_15 = arith.constant 0.000000e+00 : f32
    %25 = vector.broadcast %cst_15 : f32 to vector<3x1xf32>
    %26 = arith.subf %25, %24 : vector<3x1xf32>
    %27 = math.exp %26 : vector<3x1xf32>
    %cst_16 = arith.constant 1.000000e+00 : f32
    %28 = vector.broadcast %cst_16 : f32 to vector<3x1xf32>
    %29 = arith.addf %28, %27 : vector<3x1xf32>
    %30 = math.log %29 : vector<3x1xf32>
    %31 = arith.addf %23, %30 : vector<3x1xf32>
    %cst_17 = arith.constant 1.000000e+00 : f32
    %32 = vector.broadcast %cst_17 : f32 to vector<3x1xf32>
    %33 = arith.addf %31, %32 : vector<3x1xf32>
    %34 = vector.extract_strided_slice %13 {offsets = [0, 9], sizes = [3, 1], strides = [1, 1]} : vector<3x128xf32> to vector<3x1xf32>
    %cst_18 = arith.constant 0.000000e+00 : f32
    %35 = vector.broadcast %cst_18 : f32 to vector<3x1xf32>
    %36 = arith.subf %35, %34 : vector<3x1xf32>
    %37 = math.exp %36 : vector<3x1xf32>
    %cst_19 = arith.constant 1.000000e+00 : f32
    %38 = vector.broadcast %cst_19 : f32 to vector<3x1xf32>
    %39 = arith.addf %38, %37 : vector<3x1xf32>
    %40 = tpu.reciprocal %39 {approx = true} : vector<3x1xf32> -> vector<3x1xf32>
    %41 = vector.extract_strided_slice %13 {offsets = [0, 10], sizes = [3, 3], strides = [1, 1]} : vector<3x128xf32> to vector<3x3xf32>
    %42 = vector.extract_strided_slice %13 {offsets = [0, 13], sizes = [3, 1], strides = [1, 1]} : vector<3x128xf32> to vector<3x1xf32>
    %cst_20 = arith.constant 0.000000e+00 : f32
    %43 = vector.broadcast %cst_20 : f32 to vector<3x1xf32>
    %44 = arith.maximumf %42, %43 : vector<3x1xf32>
    %45 = math.absf %42 : vector<3x1xf32>
    %cst_21 = arith.constant 0.000000e+00 : f32
    %46 = vector.broadcast %cst_21 : f32 to vector<3x1xf32>
    %47 = arith.subf %46, %45 : vector<3x1xf32>
    %48 = math.exp %47 : vector<3x1xf32>
    %cst_22 = arith.constant 1.000000e+00 : f32
    %49 = vector.broadcast %cst_22 : f32 to vector<3x1xf32>
    %50 = arith.addf %49, %48 : vector<3x1xf32>
    %51 = math.log %50 : vector<3x1xf32>
    %52 = arith.addf %44, %51 : vector<3x1xf32>
    %cst_23 = arith.constant 1.000000e+00 : f32
    %53 = vector.broadcast %cst_23 : f32 to vector<3x1xf32>
    %54 = arith.addf %52, %53 : vector<3x1xf32>
    %cst_24 = arith.constant dense<0xFF800000> : vector<3xf32>
    %55 = vector.multi_reduction <maximumf>, %41, %cst_24 [1] : vector<3x3xf32> to vector<3xf32>
    %56 = vector.shape_cast %55 : vector<3xf32> to vector<3x1xf32>
    %57 = vector.broadcast %56 : vector<3x1xf32> to vector<3x3xf32>
    %58 = arith.subf %41, %57 : vector<3x3xf32>
    %59 = math.exp %58 : vector<3x3xf32>
    %cst_25 = arith.constant dense<0.000000e+00> : vector<3xf32>
    %60 = vector.multi_reduction <add>, %59, %cst_25 [1] : vector<3x3xf32> to vector<3xf32>
    %61 = vector.shape_cast %60 : vector<3xf32> to vector<3x1xf32>
    %62 = tpu.reciprocal %61 {approx = true} : vector<3x1xf32> -> vector<3x1xf32>
    %63 = vector.broadcast %62 : vector<3x1xf32> to vector<3x3xf32>
    %64 = arith.mulf %59, %63 : vector<3x3xf32>
    %65 = arith.mulf %3, %3 : vector<8x128xf32>
    %cst_26 = arith.constant dense<0.000000e+00> : vector<128xf32>
    %66 = vector.multi_reduction <add>, %65, %cst_26 [0] : vector<8x128xf32> to vector<128xf32>
    %67 = vector.shape_cast %66 : vector<128xf32> to vector<1x128xf32>
    %cst_27 = arith.constant 1.000000e-24 : f32
    %68 = vector.broadcast %cst_27 : f32 to vector<1x128xf32>
    %69 = arith.maximumf %67, %68 : vector<1x128xf32>
    %70 = math.rsqrt %69 : vector<1x128xf32>
    %71 = arith.mulf %20, %20 : vector<3x8xf32>
    %cst_28 = arith.constant dense<0.000000e+00> : vector<3xf32>
    %72 = vector.multi_reduction <add>, %71, %cst_28 [1] : vector<3x8xf32> to vector<3xf32>
    %73 = vector.shape_cast %72 : vector<3xf32> to vector<3x1xf32>
    %cst_29 = arith.constant 1.000000e-24 : f32
    %74 = vector.broadcast %cst_29 : f32 to vector<3x1xf32>
    %75 = arith.maximumf %73, %74 : vector<3x1xf32>
    %76 = math.rsqrt %75 : vector<3x1xf32>
    %cst_30 = arith.constant dense<0.000000e+00> : vector<3x128xf32>
    %77 = tpu.matmul %20, %3, %cst_30 {dimension_numbers = #tpu.dot_dimension_numbers<[1], [0], [0], [1], [0, 0, 1, 1], [], []>} : vector<3x8xf32>, vector<8x128xf32>, vector<3x128xf32> -> vector<3x128xf32>
    %78 = arith.mulf %76, %33 : vector<3x1xf32>
    %79 = vector.broadcast %78 : vector<3x1xf32> to vector<3x128xf32>
    %80 = arith.mulf %77, %79 : vector<3x128xf32>
    %81 = vector.broadcast %70 : vector<1x128xf32> to vector<3x128xf32>
    %82 = arith.mulf %80, %81 : vector<3x128xf32>
    %cst_31 = arith.constant dense<0xFF800000> : vector<3xf32>
    %83 = vector.multi_reduction <maximumf>, %82, %cst_31 [1] : vector<3x128xf32> to vector<3xf32>
    %84 = vector.shape_cast %83 : vector<3xf32> to vector<3x1xf32>
    %85 = vector.broadcast %84 : vector<3x1xf32> to vector<3x128xf32>
    %86 = arith.subf %82, %85 : vector<3x128xf32>
    %87 = math.exp %86 : vector<3x128xf32>
    %cst_32 = arith.constant dense<0.000000e+00> : vector<3xf32>
    %88 = vector.multi_reduction <add>, %87, %cst_32 [1] : vector<3x128xf32> to vector<3xf32>
    %89 = vector.shape_cast %88 : vector<3xf32> to vector<3x1xf32>
    %90 = vector.broadcast %89 : vector<3x1xf32> to vector<3x128xf32>
    %91 = arith.divf %87, %90 : vector<3x128xf32>
    %92 = vector.broadcast %40 : vector<3x1xf32> to vector<3x128xf32>
    %93 = arith.mulf %92, %91 : vector<3x128xf32>
    %cst_33 = arith.constant 1.000000e+00 : f32
    %94 = vector.broadcast %cst_33 : f32 to vector<3x1xf32>
    %95 = arith.subf %94, %40 : vector<3x1xf32>
    %96 = vector.broadcast %95 : vector<3x1xf32> to vector<3x128xf32>
    %97 = arith.mulf %96, %5 : vector<3x128xf32>
    %98 = arith.addf %93, %97 : vector<3x128xf32>
    %99 = vector.extract_strided_slice %64 {offsets = [0, 1], sizes = [3, 1], strides = [1, 1]} : vector<3x3xf32> to vector<3x1xf32>
    %100 = vector.broadcast %99 : vector<3x1xf32> to vector<3x128xf32>
    %101 = arith.mulf %100, %98 : vector<3x128xf32>
    %102 = vector.extract_strided_slice %64 {offsets = [0, 0], sizes = [3, 1], strides = [1, 1]} : vector<3x3xf32> to vector<3x1xf32>
    %c1_i32 = arith.constant 1 : i32
    %103 = tpu.dynamic_rotate %98 by %c1_i32 dim 1 : vector<3x128xf32>, i32 -> vector<3x128xf32>
    %104 = vector.broadcast %102 : vector<3x1xf32> to vector<3x128xf32>
    %105 = arith.mulf %104, %103 : vector<3x128xf32>
    %106 = arith.addf %101, %105 : vector<3x128xf32>
    %107 = vector.extract_strided_slice %64 {offsets = [0, 2], sizes = [3, 1], strides = [1, 1]} : vector<3x3xf32> to vector<3x1xf32>
    %c127_i32 = arith.constant 127 : i32
    %108 = tpu.dynamic_rotate %98 by %c127_i32 dim 1 : vector<3x128xf32>, i32 -> vector<3x128xf32>
    %109 = vector.broadcast %107 : vector<3x1xf32> to vector<3x128xf32>
    %110 = arith.mulf %109, %108 : vector<3x128xf32>
    %111 = arith.addf %106, %110 : vector<3x128xf32>
    %cst_34 = arith.constant 9.99999996E-13 : f32
    %112 = vector.broadcast %cst_34 : f32 to vector<3x128xf32>
    %113 = arith.addf %111, %112 : vector<3x128xf32>
    %114 = math.log %113 : vector<3x128xf32>
    %115 = vector.broadcast %54 : vector<3x1xf32> to vector<3x128xf32>
    %116 = arith.mulf %115, %114 : vector<3x128xf32>
    %117 = math.exp %116 : vector<3x128xf32>
    %cst_35 = arith.constant dense<0.000000e+00> : vector<3xf32>
    %118 = vector.multi_reduction <add>, %117, %cst_35 [1] : vector<3x128xf32> to vector<3xf32>
    %119 = vector.shape_cast %118 : vector<3xf32> to vector<3x1xf32>
    %cst_36 = arith.constant 9.99999996E-13 : f32
    %120 = vector.broadcast %cst_36 : f32 to vector<3x1xf32>
    %121 = arith.maximumf %119, %120 : vector<3x1xf32>
    %122 = vector.broadcast %121 : vector<3x1xf32> to vector<3x128xf32>
    %123 = arith.divf %117, %122 : vector<3x128xf32>
    %cst_37 = arith.constant dense<0.000000e+00> : vector<3x8xf32>
    %124 = tpu.matmul %123, %3, %cst_37 {dimension_numbers = #tpu.dot_dimension_numbers<[1], [1], [0], [0], [0, 0, 1, 0], [], []>} : vector<3x128xf32>, vector<8x128xf32>, vector<3x8xf32> -> vector<3x8xf32>
    %125 = vector.extract_strided_slice %9 {offsets = [0, 384], sizes = [1, 16], strides = [1, 1]} : vector<1x512xf32> to vector<1x16xf32>
    %126 = vector.extract_strided_slice %125 {offsets = [0, 0], sizes = [1, 8], strides = [1, 1]} : vector<1x16xf32> to vector<1x8xf32>
    %cst_38 = arith.constant 0.000000e+00 : f32
    %127 = vector.broadcast %cst_38 : f32 to vector<1x8xf32>
    %128 = arith.subf %127, %126 : vector<1x8xf32>
    %129 = math.exp %128 : vector<1x8xf32>
    %cst_39 = arith.constant 1.000000e+00 : f32
    %130 = vector.broadcast %cst_39 : f32 to vector<1x8xf32>
    %131 = arith.addf %130, %129 : vector<1x8xf32>
    %cst_40 = arith.constant 1.000000e+00 : f32
    %132 = vector.broadcast %cst_40 : f32 to vector<1x8xf32>
    %133 = arith.divf %132, %131 : vector<1x8xf32>
    %134 = vector.shape_cast %133 : vector<1x8xf32> to vector<1x8x1xf32>
    %135 = vector.extract_strided_slice %125 {offsets = [0, 8], sizes = [1, 8], strides = [1, 1]} : vector<1x16xf32> to vector<1x8xf32>
    %cst_41 = arith.constant 0.000000e+00 : f32
    %136 = vector.broadcast %cst_41 : f32 to vector<1x8xf32>
    %137 = arith.subf %136, %135 : vector<1x8xf32>
    %138 = math.exp %137 : vector<1x8xf32>
    %cst_42 = arith.constant 1.000000e+00 : f32
    %139 = vector.broadcast %cst_42 : f32 to vector<1x8xf32>
    %140 = arith.addf %139, %138 : vector<1x8xf32>
    %cst_43 = arith.constant 1.000000e+00 : f32
    %141 = vector.broadcast %cst_43 : f32 to vector<1x8xf32>
    %142 = arith.divf %141, %140 : vector<1x8xf32>
    %143 = vector.shape_cast %142 : vector<1x8xf32> to vector<1x8x1xf32>
    %144 = vector.extract_strided_slice %123 {offsets = [2, 0], sizes = [1, 128], strides = [1, 1]} : vector<3x128xf32> to vector<1x128xf32>
    %145 = vector.shape_cast %144 : vector<1x128xf32> to vector<1x1x128xf32>
    %146 = vector.shape_cast %3 : vector<8x128xf32> to vector<1x8x128xf32>
    %147 = vector.broadcast %134 : vector<1x8x1xf32> to vector<1x8x128xf32>
    %148 = vector.broadcast %145 : vector<1x1x128xf32> to vector<1x8x128xf32>
    %149 = arith.mulf %147, %148 : vector<1x8x128xf32>
    %cst_44 = arith.constant 1.000000e+00 : f32
    %150 = vector.broadcast %cst_44 : f32 to vector<1x8x128xf32>
    %151 = arith.subf %150, %149 : vector<1x8x128xf32>
    %152 = arith.mulf %146, %151 : vector<1x8x128xf32>
    %153 = vector.broadcast %143 : vector<1x8x1xf32> to vector<1x8x128xf32>
    %154 = vector.broadcast %145 : vector<1x1x128xf32> to vector<1x8x128xf32>
    %155 = arith.mulf %153, %154 : vector<1x8x128xf32>
    %156 = arith.addf %152, %155 : vector<1x8x128xf32>
    %c0_45 = arith.constant 0 : index
    %c0_46 = arith.constant 0 : index
    %c0_47 = arith.constant 0 : index
    %157 = vector.load %arg6[%c0_45, %c0_46, %c0_47] : memref<1x8x128xf32, #tpu.memory_space<vmem>>, vector<1x8x128xf32>
    tpu.vector_store %arg6[%c0_45, %c0_46, %c0_47], %156 {strides = array<i32>} : memref<1x8x128xf32, #tpu.memory_space<vmem>>, vector<1x8x128xf32>,
    %158 = vector.shape_cast %123 : vector<3x128xf32> to vector<1x3x128xf32>
    %c0_48 = arith.constant 0 : index
    %c0_49 = arith.constant 0 : index
    %c0_50 = arith.constant 0 : index
    %159 = vector.load %arg7[%c0_48, %c0_49, %c0_50] : memref<1x3x384xf32, #tpu.memory_space<vmem>>, vector<1x3x128xf32>
    tpu.vector_store %arg7[%c0_48, %c0_49, %c0_50], %158 {strides = array<i32>} : memref<1x3x384xf32, #tpu.memory_space<vmem>>, vector<1x3x128xf32>,
    %160 = vector.shape_cast %91 : vector<3x128xf32> to vector<1x3x128xf32>
    %c0_51 = arith.constant 0 : index
    %c0_52 = arith.constant 0 : index
    %c128 = arith.constant 128 : index
    %161 = vector.load %arg7[%c0_51, %c0_52, %c128] : memref<1x3x384xf32, #tpu.memory_space<vmem>>, vector<1x3x128xf32>
    tpu.vector_store %arg7[%c0_51, %c0_52, %c128], %160 {strides = array<i32>} : memref<1x3x384xf32, #tpu.memory_space<vmem>>, vector<1x3x128xf32>,
    %162 = vector.shape_cast %124 : vector<3x8xf32> to vector<1x3x8xf32>
    %c0_53 = arith.constant 0 : index
    %c0_54 = arith.constant 0 : index
    %c256 = arith.constant 256 : index
    %163 = vector.load %arg7[%c0_53, %c0_54, %c256] : memref<1x3x384xf32, #tpu.memory_space<vmem>>, vector<1x3x8xf32>
    tpu.vector_store %arg7[%c0_53, %c0_54, %c256], %162 {strides = array<i32>} : memref<1x3x384xf32, #tpu.memory_space<vmem>>, vector<1x3x8xf32>,
    %164 = vector.shape_cast %40 : vector<3x1xf32> to vector<1x3x1xf32>
    %c0_55 = arith.constant 0 : index
    %c0_56 = arith.constant 0 : index
    %c264 = arith.constant 264 : index
    %165 = vector.load %arg7[%c0_55, %c0_56, %c264] : memref<1x3x384xf32, #tpu.memory_space<vmem>>, vector<1x3x1xf32>
    tpu.vector_store %arg7[%c0_55, %c0_56, %c264], %164 {strides = array<i32>} : memref<1x3x384xf32, #tpu.memory_space<vmem>>, vector<1x3x1xf32>,
    %166 = vector.shape_cast %64 : vector<3x3xf32> to vector<1x3x3xf32>
    %c0_57 = arith.constant 0 : index
    %c0_58 = arith.constant 0 : index
    %c265 = arith.constant 265 : index
    %167 = vector.load %arg7[%c0_57, %c0_58, %c265] : memref<1x3x384xf32, #tpu.memory_space<vmem>>, vector<1x3x3xf32>
    tpu.vector_store %arg7[%c0_57, %c0_58, %c265], %166 {strides = array<i32>} : memref<1x3x384xf32, #tpu.memory_space<vmem>>, vector<1x3x3xf32>,
    return
  }
  func.func @transform_0(%arg0: i32) -> (i32, i32, i32) {
    %c0_i32 = arith.constant 0 : i32
    %c0_i32_0 = arith.constant 0 : i32
    %c0_i32_1 = arith.constant 0 : i32
    return %arg0, %c0_i32, %c0_i32_0 : i32, i32, i32
  }
  func.func @transform_1(%arg0: i32) -> (i32, i32, i32) {
    %c0_i32 = arith.constant 0 : i32
    %c0_i32_0 = arith.constant 0 : i32
    %c0_i32_1 = arith.constant 0 : i32
    return %arg0, %c0_i32, %c0_i32_0 : i32, i32, i32
  }
  func.func @transform_2(%arg0: i32) -> (i32, i32, i32) {
    %c0_i32 = arith.constant 0 : i32
    %c0_i32_0 = arith.constant 0 : i32
    %c0_i32_1 = arith.constant 0 : i32
    return %arg0, %c0_i32, %c0_i32_0 : i32, i32, i32
  }
  func.func @transform_3(%arg0: i32) -> (i32, i32) {
    %c0_i32 = arith.constant 0 : i32
    %c0_i32_0 = arith.constant 0 : i32
    %c0_i32_1 = arith.constant 0 : i32
    return %c0_i32, %c0_i32_0 : i32, i32
  }
  func.func @transform_4(%arg0: i32) -> (i32, i32) {
    %c0_i32 = arith.constant 0 : i32
    %c0_i32_0 = arith.constant 0 : i32
    %c0_i32_1 = arith.constant 0 : i32
    return %c0_i32, %c0_i32_0 : i32, i32
  }
  func.func @transform_5(%arg0: i32) -> (i32, i32, i32) {
    %c0_i32 = arith.constant 0 : i32
    %c0_i32_0 = arith.constant 0 : i32
    %c0_i32_1 = arith.constant 0 : i32
    return %arg0, %c0_i32, %c0_i32_0 : i32, i32, i32
  }
  func.func @transform_6(%arg0: i32) -> (i32, i32, i32) {
    %c0_i32 = arith.constant 0 : i32
    %c0_i32_0 = arith.constant 0 : i32
    %c0_i32_1 = arith.constant 0 : i32
    return %arg0, %c0_i32, %c0_i32_0 : i32, i32, i32
  }
}

</mosaic_0001>

<llo_original>
// kernel: tpu_custom_call.1
$region0: #{tpu_custom_call.1}
  #allocation0 [shape = 'u32[]', space=smem, size = 0x4, offset = 0x4, fixed_abs, tag = 'smem constant byte address 0x4 - core index']
  #allocation1 [shape = 'u32[144,128]{1,0:T(1,128)}', space=vmem, size = 0x12000, scoped, tag = 'internal scratch']
  %s0 = inlined_call_operand.vmem [shape: f32[2,1,32], index: 0, kind: input, shape index: {}]
  %s1 = inlined_call_operand.vmem [shape: f32[2,8,128], index: 1, kind: input, shape index: {}, may-alias: {1,5}]
  %s2 = inlined_call_operand.vmem [shape: f32[2,3,128], index: 2, kind: input, shape index: {}]
  %s3 = inlined_call_operand.hbm [shape: f32[32,512], index: 3, kind: input, shape index: {}]
  %s4 = inlined_call_operand.vmem [shape: f32[1,512], index: 4, kind: input, shape index: {}]
  %s5 = inlined_call_operand.vmem [shape: f32[2,8,128], index: 5, kind: output, shape index: {0}, may-alias: {1,5}]
  %s6 = inlined_call_operand.vmem [shape: f32[2,3,384], index: 6, kind: output, shape index: {1}]
  %7 = xla_tuple %s5, %s6
  %s8 = sld [smem:[#allocation0]]
  $region65: #{tpu_custom_call.1} parent=0
    _
  %s10 = ssub.s32 1, %s8
  %s11 = scalar_select 0, %s10, %s8
  $region1: #{tpu_custom_call.1} parent=0
    #allocation2 [shape = 'u8[65536]{0}', space=vmem, size = 0x10000, scoped, tag = 'input window, operand 3, single buffered']
    #allocation3 [shape = 's32[2]{0}', space=sflag, size = 0x8, scoped, tag = 'scoped memory for tpu_custom_call.1']
    %12 = vsyncpa [#allocation3], 0
    loop: start=0, step=1, limit=4
    $region2: #{tpu_custom_call.1} parent=1 // loop_pre_header
      _
    $region3: #{tpu_custom_call.1} parent=1 // loop_header
      %s14 = sphi 0, %s18
      %p15 = scmp.ge.s32.totalorder %s14, 4
      %s24 = sphi 0, %s26
      %s27 = sphi 0, %s24
      %s28 = sphi 0, %s27
      %s44 = sphi 0, %s28
      %s50 = sphi 0, %s52
      %s53 = sphi 0, %s50
      %s54 = sphi 0, %s53
      %s70 = sphi 0, %s54
      %s76 = sphi 0, %s78
      %s79 = sphi 0, %s76
      %s80 = sphi 0, %s79
      %s96 = sphi 0, %s80
      %s100 = sphi 0, %s100
      %s102 = sphi 0, %s100
      %s103 = sphi 0, %s102
      %s117 = sphi 0, %s103
      %s121 = sphi 0, %s121
      %s123 = sphi 0, %s121
      %s124 = sphi 0, %s123
      %s138 = sphi 0, %s124
      %s144 = sphi 0, %s146
      %s147 = sphi 0, %s144
      %s148 = sphi 0, %s147
      %s164 = sphi 0, %s148
      %s170 = sphi 0, %s172
      %s173 = sphi 0, %s170
      %s174 = sphi 0, %s173
      %s190 = sphi 0, %s174
    $region4: #{tpu_custom_call.1} parent=1 // loop_header_branch
      %17 = sbr.rel (%p15) target = $region8
    $region5: #{tpu_custom_call.1} parent=1 // loop_body
      %s19 = ssub.s32 %s14, 1
      %s20 = ssub.s32 %s14, 2
      %s21 = sadd.s32 %s14, 1
      %s22 = ssub.s32 %s14, %s21
      %p23 = scmp.eq.s32.totalorder %s22, 0
      %s25 = sadd.s32 %s24, 1
      %s26 = scalar_select %p23, %s24, %s25
      %p29 = pneg %p23
      %p30 = scmp.eq.s32.totalorder %s14, 1
      %p31 = por %p29, %p30
      %p32 = scmp.ne.s32.totalorder %s24, %s27
      %p33 = scmp.eq.s32.totalorder %s14, 0
      %p34 = por %p32, %p33
      %p35 = scmp.ne.s32.totalorder %s24, %s27
      %p36 = scmp.eq.s32.totalorder %s19, 1
      %p37 = por %p35, %p36
      %p38 = scmp.ne.s32.totalorder %s27, %s28
      %p39 = scmp.eq.s32.totalorder %s19, 0
      %p40 = por %p38, %p39
      %p41 = scmp.ne.s32.totalorder %s27, %s28
      %p42 = scmp.eq.s32.totalorder %s20, 1
      %p43 = por %p41, %p42
      %p45 = scmp.ne.s32.totalorder %s28, %s44
      %p46 = scmp.eq.s32.totalorder %s20, 0
      %p47 = por %p45, %p46
      %s48 = ssub.s32 %s14, %s21
      %p49 = scmp.eq.s32.totalorder %s48, 0
      %s51 = sadd.s32 %s50, 1
      %s52 = scalar_select %p49, %s50, %s51
      %p55 = pneg %p49
      %p56 = scmp.eq.s32.totalorder %s14, 1
      %p57 = por %p55, %p56
      %p58 = scmp.ne.s32.totalorder %s50, %s53
      %p59 = scmp.eq.s32.totalorder %s14, 0
      %p60 = por %p58, %p59
      %p61 = scmp.ne.s32.totalorder %s50, %s53
      %p62 = scmp.eq.s32.totalorder %s19, 1
      %p63 = por %p61, %p62
      %p64 = scmp.ne.s32.totalorder %s53, %s54
      %p65 = scmp.eq.s32.totalorder %s19, 0
      %p66 = por %p64, %p65
      %p67 = scmp.ne.s32.totalorder %s53, %s54
      %p68 = scmp.eq.s32.totalorder %s20, 1
      %p69 = por %p67, %p68
      %p71 = scmp.ne.s32.totalorder %s54, %s70
      %p72 = scmp.eq.s32.totalorder %s20, 0
      %p73 = por %p71, %p72
      %s74 = ssub.s32 %s14, %s21
      %p75 = scmp.eq.s32.totalorder %s74, 0
      %s77 = sadd.s32 %s76, 1
      %s78 = scalar_select %p75, %s76, %s77
      %p81 = pneg %p75
      %p82 = scmp.eq.s32.totalorder %s14, 1
      %p83 = por %p81, %p82
      %p84 = scmp.ne.s32.totalorder %s76, %s79
      %p85 = scmp.eq.s32.totalorder %s14, 0
      %p86 = por %p84, %p85
      %p87 = scmp.ne.s32.totalorder %s76, %s79
      %p88 = scmp.eq.s32.totalorder %s19, 1
      %p89 = por %p87, %p88
      %p90 = scmp.ne.s32.totalorder %s79, %s80
      %p91 = scmp.eq.s32.totalorder %s19, 0
      %p92 = por %p90, %p91
      %p93 = scmp.ne.s32.totalorder %s79, %s80
      %p94 = scmp.eq.s32.totalorder %s20, 1
      %p95 = por %p93, %p94
      %p97 = scmp.ne.s32.totalorder %s80, %s96
      %p98 = scmp.eq.s32.totalorder %s20, 0
      %p99 = por %p97, %p98
      %s101 = sadd.s32 %s100, 1
      %p104 = scmp.eq.s32.totalorder %s14, 1
      %p105 = scmp.ne.s32.totalorder %s100, %s102
      %p106 = scmp.eq.s32.totalorder %s14, 0
      %p107 = por %p105, %p106
      %p108 = scmp.ne.s32.totalorder %s100, %s102
      %p109 = scmp.eq.s32.totalorder %s19, 1
      %p110 = por %p108, %p109
      %p111 = scmp.ne.s32.totalorder %s102, %s103
      %p112 = scmp.eq.s32.totalorder %s19, 0
      %p113 = por %p111, %p112
      %p114 = scmp.ne.s32.totalorder %s102, %s103
      %p115 = scmp.eq.s32.totalorder %s20, 1
      %p116 = por %p114, %p115
      %p118 = scmp.ne.s32.totalorder %s103, %s117
      %p119 = scmp.eq.s32.totalorder %s20, 0
      %p120 = por %p118, %p119
      %s122 = sadd.s32 %s121, 1
      %p125 = scmp.eq.s32.totalorder %s14, 1
      %p126 = scmp.ne.s32.totalorder %s121, %s123
      %p127 = scmp.eq.s32.totalorder %s14, 0
      %p128 = por %p126, %p127
      %p129 = scmp.ne.s32.totalorder %s121, %s123
      %p130 = scmp.eq.s32.totalorder %s19, 1
      %p131 = por %p129, %p130
      %p132 = scmp.ne.s32.totalorder %s123, %s124
      %p133 = scmp.eq.s32.totalorder %s19, 0
      %p134 = por %p132, %p133
      %p135 = scmp.ne.s32.totalorder %s123, %s124
      %p136 = scmp.eq.s32.totalorder %s20, 1
      %p137 = por %p135, %p136
      %p139 = scmp.ne.s32.totalorder %s124, %s138
      %p140 = scmp.eq.s32.totalorder %s20, 0
      %p141 = por %p139, %p140
      %s142 = ssub.s32 %s14, %s21
      %p143 = scmp.eq.s32.totalorder %s142, 0
      %s145 = sadd.s32 %s144, 1
      %s146 = scalar_select %p143, %s144, %s145
      %p149 = pneg %p143
      %p150 = scmp.eq.s32.totalorder %s14, 1
      %p151 = por %p149, %p150
      %p152 = scmp.ne.s32.totalorder %s144, %s147
      %p153 = scmp.eq.s32.totalorder %s14, 0
      %p154 = por %p152, %p153
      %p155 = scmp.ne.s32.totalorder %s144, %s147
      %p156 = scmp.eq.s32.totalorder %s19, 1
      %p157 = por %p155, %p156
      %p158 = scmp.ne.s32.totalorder %s147, %s148
      %p159 = scmp.eq.s32.totalorder %s19, 0
      %p160 = por %p158, %p159
      %p161 = scmp.ne.s32.totalorder %s147, %s148
      %p162 = scmp.eq.s32.totalorder %s20, 1
      %p163 = por %p161, %p162
      %p165 = scmp.ne.s32.totalorder %s148, %s164
      %p166 = scmp.eq.s32.totalorder %s20, 0
      %p167 = por %p165, %p166
      %s168 = ssub.s32 %s14, %s21
      %p169 = scmp.eq.s32.totalorder %s168, 0
      %s171 = sadd.s32 %s170, 1
      %s172 = scalar_select %p169, %s170, %s171
      %p175 = pneg %p169
      %p176 = scmp.eq.s32.totalorder %s14, 1
      %p177 = por %p175, %p176
      %p178 = scmp.ne.s32.totalorder %s170, %s173
      %p179 = scmp.eq.s32.totalorder %s14, 0
      %p180 = por %p178, %p179
      %p181 = scmp.ne.s32.totalorder %s170, %s173
      %p182 = scmp.eq.s32.totalorder %s19, 1
      %p183 = por %p181, %p182
      %p184 = scmp.ne.s32.totalorder %s173, %s174
      %p185 = scmp.eq.s32.totalorder %s19, 0
      %p186 = por %p184, %p185
      %p187 = scmp.ne.s32.totalorder %s173, %s174
      %p188 = scmp.eq.s32.totalorder %s20, 1
      %p189 = por %p187, %p188
      %p191 = scmp.ne.s32.totalorder %s174, %s190
      %p192 = scmp.eq.s32.totalorder %s20, 0
      %p193 = por %p191, %p192
      %p194 = scmp.le.s32.totalorder 1, %s14
      %p195 = scmp.lt.s32.totalorder %s14, 3
      %p196 = pnand %p194, %p195
      %p197 = pneg %p196
      // Predicated region
      $region9: #{tpu_custom_call.1} parent=5 // pred_check
        _
      $region10: #{tpu_custom_call.1} parent=5 // pred_check_branch
        %199 = sbr.rel (%p196) target = $region12
      $region11: #{tpu_custom_call.1} parent=5 // pred_region
        %s200 = ssub.s32 %s14, 1
        // Predicated region
        $region13: #{tpu_custom_call.1} parent=11 // pred_check
          %p201 = pneg %p113
        $region14: #{tpu_custom_call.1} parent=11 // pred_check_branch
          %203 = sbr.rel (%p201) target = $region16
        $region15: #{tpu_custom_call.1} parent=11 // pred_region
          %s205 = ssub.s32 2048, 2048
          %206 = vsyncadd [#allocation3], %s205
          %s207 = sshll.u32 [#allocation2], 4
          %s208 = int_to_ptr.vmem [resolvable:$true] %s207
          %213 = dma.hbm_to_vmem [thread:$0]  %s3, 2048, %s208, [#allocation3], 512, 512, 32
        $region16: #{tpu_custom_call.1} parent=11 // pred_fallthru
          _
        // Predicated region
        $region17: #{tpu_custom_call.1} parent=11 // pred_check
          %p214 = pneg %p134
        $region18: #{tpu_custom_call.1} parent=11 // pred_check_branch
          %216 = sbr.rel (%p214) target = $region20
        $region19: #{tpu_custom_call.1} parent=11 // pred_region
          _
        $region20: #{tpu_custom_call.1} parent=11 // pred_fallthru
          _
      $region12: #{tpu_custom_call.1} parent=5 // pred_fallthru
        _
      %p217 = scmp.lt.s32.totalorder %s14, 2
      // Predicated region
      $region21: #{tpu_custom_call.1} parent=5 // pred_check
        %p218 = pneg %p217
      $region22: #{tpu_custom_call.1} parent=5 // pred_check_branch
        %220 = sbr.rel (%p218) target = $region24
      $region23: #{tpu_custom_call.1} parent=5 // pred_region
        // Predicated region
        $region25: #{tpu_custom_call.1} parent=23 // pred_check
          %p221 = pneg %p34
        $region26: #{tpu_custom_call.1} parent=23 // pred_check_branch
          %223 = sbr.rel (%p221) target = $region28
        $region27: #{tpu_custom_call.1} parent=23 // pred_region
          %p224 = scmp.lt.s32.totalorder %s14, 1
          %s225 = scalar_select %p224, %s14, 1
          %s226 = scalar_lea.vmem %s0, %s225
        $region28: #{tpu_custom_call.1} parent=23 // pred_fallthru
          _
        // Predicated region
        $region29: #{tpu_custom_call.1} parent=23 // pred_check
          %p227 = pneg %p60
        $region30: #{tpu_custom_call.1} parent=23 // pred_check_branch
          %229 = sbr.rel (%p227) target = $region32
        $region31: #{tpu_custom_call.1} parent=23 // pred_region
          %p230 = scmp.lt.s32.totalorder %s14, 1
          %s231 = scalar_select %p230, %s14, 1
          %s232 = smul.addr %s231, 8
          %s233 = scalar_lea.vmem %s1, %s232
        $region32: #{tpu_custom_call.1} parent=23 // pred_fallthru
          _
        // Predicated region
        $region33: #{tpu_custom_call.1} parent=23 // pred_check
          %p234 = pneg %p86
        $region34: #{tpu_custom_call.1} parent=23 // pred_check_branch
          %236 = sbr.rel (%p234) target = $region36
        $region35: #{tpu_custom_call.1} parent=23 // pred_region
          %p237 = scmp.lt.s32.totalorder %s14, 1
          %s238 = scalar_select %p237, %s14, 1
          %s239 = smul.addr %s238, 4
          %s240 = scalar_lea.vmem %s2, %s239
        $region36: #{tpu_custom_call.1} parent=23 // pred_fallthru
          _
      $region24: #{tpu_custom_call.1} parent=5 // pred_fallthru
        _
      %p241 = scmp.le.s32.totalorder 1, %s14
      %p242 = scmp.lt.s32.totalorder %s14, 3
      %p243 = pnand %p241, %p242
      %p244 = pneg %p243
      // Predicated region
      $region37: #{tpu_custom_call.1} parent=5 // pred_check
        _
      $region38: #{tpu_custom_call.1} parent=5 // pred_check_branch
        %246 = sbr.rel (%p243) target = $region40
      $region39: #{tpu_custom_call.1} parent=5 // pred_region
        %s247 = ssub.s32 %s14, 1
        // Predicated region
        $region41: #{tpu_custom_call.1} parent=39 // pred_check
          %p248 = pneg %p113
        $region42: #{tpu_custom_call.1} parent=39 // pred_check_branch
          %250 = sbr.rel (%p248) target = $region44
        $region43: #{tpu_custom_call.1} parent=39 // pred_region
          %251 = dma.done [#allocation3], 2048
        $region44: #{tpu_custom_call.1} parent=39 // pred_fallthru
          _
        %p252 = scmp.lt.s32.totalorder %s19, 1
        %s253 = scalar_select %p252, %s19, 1
        %s254 = scalar_lea.vmem %s0, %s253
        %p255 = pneg %p40
        %p256 = pneg %p37
        %p257 = scmp.lt.s32.totalorder %s19, 1
        %s258 = scalar_select %p257, %s19, 1
        %s259 = smul.addr %s258, 8
        %s260 = scalar_lea.vmem %s1, %s259
        %p261 = pneg %p66
        %p262 = pneg %p63
        %p263 = scmp.lt.s32.totalorder %s19, 1
        %s264 = scalar_select %p263, %s19, 1
        %s265 = smul.addr %s264, 4
        %s266 = scalar_lea.vmem %s2, %s265
        %p267 = pneg %p92
        %p268 = pneg %p89
        %p269 = pneg %p113
        %p270 = pneg %p110
        %p271 = pneg %p134
        %p272 = pneg %p131
        %p273 = pneg %p160
        %p274 = pneg %p157
        %p275 = scmp.lt.s32.totalorder %s19, 1
        %s276 = scalar_select %p275, %s19, 1
        %s277 = smul.addr %s276, 8
        %s278 = scalar_lea.vmem %s5, %s277
        %p279 = pneg %p186
        %p280 = pneg %p183
        %p281 = scmp.lt.s32.totalorder %s19, 1
        %s282 = scalar_select %p281, %s19, 1
        %s283 = smul.addr %s282, 3
        %s284 = smul.addr %s283, 4
        %s285 = scalar_lea.vmem %s6, %s284
        %p286 = scmp.lt.s32.totalorder %s19, 1
        %s287 = scalar_select %p286, %s19, 1
        %s288 = scalar_lea.vmem %s0, %s287
        %p289 = scmp.lt.s32.totalorder %s19, 1
        %s290 = scalar_select %p289, %s19, 1
        %s291 = smul.addr %s290, 8
        %s292 = scalar_lea.vmem %s1, %s291
        %p293 = scmp.lt.s32.totalorder %s19, 1
        %s294 = scalar_select %p293, %s19, 1
        %s295 = smul.addr %s294, 4
        %s296 = scalar_lea.vmem %s2, %s295
        %p297 = scmp.lt.s32.totalorder %s19, 1
        %s298 = scalar_select %p297, %s19, 1
        %s299 = smul.addr %s298, 8
        %s300 = scalar_lea.vmem %s5, %s299
        %p301 = scmp.lt.s32.totalorder %s19, 1
        %s302 = scalar_select %p301, %s19, 1
        %s303 = smul.addr %s302, 3
        %s304 = smul.addr %s303, 4
        %s305 = scalar_lea.vmem %s6, %s304
        %v306 = vld [vmem:[%s288] sm:$0x1]
        %v307 = vld [vmem:[%s292] sm:$0xff]
        %v308 = vld [vmem:[%s296] sm:$0x7]
        %v309 = vld [vmem:[#allocation2] sm:$0xff]
        %v310 = vld [vmem:[#allocation2 + $0x8] sm:$0xff]
        %v311 = vld [vmem:[#allocation2 + $0x10] sm:$0xff]
        %v312 = vld [vmem:[#allocation2 + $0x18] sm:$0xff]
        %v313 = vld [vmem:[#allocation2 + $0x20] sm:$0xff]
        %v314 = vld [vmem:[#allocation2 + $0x28] sm:$0xff]
        %v315 = vld [vmem:[#allocation2 + $0x30] sm:$0xff]
        %v316 = vld [vmem:[#allocation2 + $0x38] sm:$0xff]
        %v317 = vld [vmem:[#allocation2 + $0x40] sm:$0xff]
        %v318 = vld [vmem:[#allocation2 + $0x48] sm:$0xff]
        %v319 = vld [vmem:[#allocation2 + $0x50] sm:$0xff]
        %v320 = vld [vmem:[#allocation2 + $0x58] sm:$0xff]
        %v321 = vld [vmem:[#allocation2 + $0x60] sm:$0xff]
        %v322 = vld [vmem:[#allocation2 + $0x68] sm:$0xff]
        %v323 = vld [vmem:[#allocation2 + $0x70] sm:$0xff]
        %v324 = vld [vmem:[#allocation2 + $0x78] sm:$0xff]
        %v325 = vld [vmem:[%s4] sm:$0xf]
        %v327 = vlaneseq
        %v328 = vshrl.u32 %v327, 7
        %v329 = vsub.s32 0, %v328
        %v330 = vrot.slane %v325, %v329
        %v331 = vlaneseq
        %v332 = vshrl.u32 %v331, 7
        %v333 = vsub.s32 1, %v332
        %v334 = vrot.slane %v325, %v333
        %v335 = vlaneseq
        %v336 = vshrl.u32 %v335, 7
        %v337 = vsub.s32 2, %v336
        %v338 = vrot.slane %v325, %v337
        %v339 = vlaneseq
        %v340 = vshrl.u32 %v339, 7
        %v341 = vsub.s32 3, %v340
        %v342 = vrot.slane %v325, %v341
        %vm347 = vcmask 261120
        %v349 = vsel %vm347, %v306, 0
        %351 = vmatprep.subr.mxu0 %v310
        %352 = vmatpush1.msra.mxu0 %v309
        %353 = vmatprep.subr.mxu0 %v314
        %354 = vmatpush1.msra.mxu0 %v313
        %355 = vmatprep.subr.mxu0 %v318
        %356 = vmatpush1.msra.mxu0 %v317
        %357 = vmatprep.subr.mxu0 %v322
        %358 = vmatpush1.msra.mxu0 %v321
        %359 = vmatprep.subr.mxu0 0.0
        %360 = vmatpush1.msra.mxu0 0.0
        %361 = vmatprep.subr.mxu0 0.0
        %362 = vmatpush1.msra.mxu0 0.0
        %363 = vmatprep.subr.mxu0 0.0
        %364 = vmatpush1.msra.mxu0 0.0
        %365 = vmatprep.subr.mxu0 0.0
        %366 = vmatpush1.msra.mxu0 0.0
        %367 = vmatprep.subr.mxu0 0.0
        %368 = vmatpush1.msra.mxu0 0.0
        %369 = vmatprep.subr.mxu0 0.0
        %370 = vmatpush1.msra.mxu0 0.0
        %371 = vmatprep.subr.mxu0 0.0
        %372 = vmatpush1.msra.mxu0 0.0
        %373 = vmatprep.subr.mxu0 0.0
        %374 = vmatpush1.msra.mxu0 0.0
        %375 = vmatprep.subr.mxu0 0.0
        %376 = vmatpush1.msra.mxu0 0.0
        %377 = vmatprep.subr.mxu0 0.0
        %378 = vmatpush1.msra.mxu0 0.0
        %379 = vmatprep.subr.mxu0 0.0
        %380 = vmatpush1.msra.mxu0 0.0
        %381 = vmatprep.subr.mxu0 0.0
        %382 = vmatpush1.msra.mxu0 0.0
        %383 = vmatprep.subr.mxu0 0.0
        %384 = vmatpush1.msra.mxu0 0.0
        %385 = vmatprep.subr.mxu0 0.0
        %386 = vmatpush1.msra.mxu0 0.0
        %387 = vmatprep.subr.mxu0 0.0
        %388 = vmatpush1.msra.mxu0 0.0
        %389 = vmatprep.subr.mxu0 0.0
        %390 = vmatpush1.msra.mxu0 0.0
        %391 = vmatprep.subr.mxu0 0.0
        %392 = vmatpush1.msra.mxu0 0.0
        %393 = vmatprep.subr.mxu0 0.0
        %394 = vmatpush1.msra.mxu0 0.0
        %395 = vmatprep.subr.mxu0 0.0
        %396 = vmatpush1.msra.mxu0 0.0
        %397 = vmatprep.subr.mxu0 0.0
        %398 = vmatpush1.msra.mxu0 0.0
        %399 = vmatprep.subr.mxu0 0.0
        %400 = vmatpush1.msra.mxu0 0.0
        %401 = vmatprep.subr.mxu0 0.0
        %402 = vmatpush1.msra.mxu0 0.0
        %403 = vmatprep.subr.mxu0 0.0
        %404 = vmatpush1.msra.mxu0 0.0
        %405 = vmatprep.subr.mxu0 0.0
        %406 = vmatpush1.msra.mxu0 0.0
        %407 = vmatprep.subr.mxu0 0.0
        %408 = vmatpush1.msra.mxu0 0.0
        %409 = vmatprep.subr.mxu0 0.0
        %410 = vmatpush1.msra.mxu0 0.0
        %411 = vmatprep.subr.mxu0 0.0
        %412 = vmatpush1.msra.mxu0 0.0
        %413 = vmatprep.subr.mxu0 0.0
        %414 = vmatpush1.msra.mxu0 0.0
        %415 = vmatprep.mubr.f32.mxu0 0.0
        %416 = vmatmul.mubr.f32.gmra.mrb[0].mxu0 %v349
        %v417 = vpop.f32.mrb[0].mxu0
        %v418 = vadd.f32 %v330, %v417
        %v419 = vpop.f32.mrb[0].mxu0
        %v420 = vadd.f32 %v334, %v419
        %421 = vdwg.mxu0
        %422 = vmatprep.subr.mxu0 %v312
        %423 = vmatpush1.msra.mxu0 %v311
        %424 = vmatprep.subr.mxu0 %v316
        %425 = vmatpush1.msra.mxu0 %v315
        %426 = vmatprep.subr.mxu0 %v320
        %427 = vmatpush1.msra.mxu0 %v319
        %428 = vmatprep.subr.mxu0 %v324
        %429 = vmatpush1.msra.mxu0 %v323
        %430 = vmatprep.subr.mxu0 0.0
        %431 = vmatpush1.msra.mxu0 0.0
        %432 = vmatprep.subr.mxu0 0.0
        %433 = vmatpush1.msra.mxu0 0.0
        %434 = vmatprep.subr.mxu0 0.0
        %435 = vmatpush1.msra.mxu0 0.0
        %436 = vmatprep.subr.mxu0 0.0
        %437 = vmatpush1.msra.mxu0 0.0
        %438 = vmatprep.subr.mxu0 0.0
        %439 = vmatpush1.msra.mxu0 0.0
        %440 = vmatprep.subr.mxu0 0.0
        %441 = vmatpush1.msra.mxu0 0.0
        %442 = vmatprep.subr.mxu0 0.0
        %443 = vmatpush1.msra.mxu0 0.0
        %444 = vmatprep.subr.mxu0 0.0
        %445 = vmatpush1.msra.mxu0 0.0
        %446 = vmatprep.subr.mxu0 0.0
        %447 = vmatpush1.msra.mxu0 0.0
        %448 = vmatprep.subr.mxu0 0.0
        %449 = vmatpush1.msra.mxu0 0.0
        %450 = vmatprep.subr.mxu0 0.0
        %451 = vmatpush1.msra.mxu0 0.0
        %452 = vmatprep.subr.mxu0 0.0
        %453 = vmatpush1.msra.mxu0 0.0
        %454 = vmatprep.subr.mxu0 0.0
        %455 = vmatpush1.msra.mxu0 0.0
        %456 = vmatprep.subr.mxu0 0.0
        %457 = vmatpush1.msra.mxu0 0.0
        %458 = vmatprep.subr.mxu0 0.0
        %459 = vmatpush1.msra.mxu0 0.0
        %460 = vmatprep.subr.mxu0 0.0
        %461 = vmatpush1.msra.mxu0 0.0
        %462 = vmatprep.subr.mxu0 0.0
        %463 = vmatpush1.msra.mxu0 0.0
        %464 = vmatprep.subr.mxu0 0.0
        %465 = vmatpush1.msra.mxu0 0.0
        %466 = vmatprep.subr.mxu0 0.0
        %467 = vmatpush1.msra.mxu0 0.0
        %468 = vmatprep.subr.mxu0 0.0
        %469 = vmatpush1.msra.mxu0 0.0
        %470 = vmatprep.subr.mxu0 0.0
        %471 = vmatpush1.msra.mxu0 0.0
        %472 = vmatprep.subr.mxu0 0.0
        %473 = vmatpush1.msra.mxu0 0.0
        %474 = vmatprep.subr.mxu0 0.0
        %475 = vmatpush1.msra.mxu0 0.0
        %476 = vmatprep.subr.mxu0 0.0
        %477 = vmatpush1.msra.mxu0 0.0
        %478 = vmatprep.subr.mxu0 0.0
        %479 = vmatpush1.msra.mxu0 0.0
        %480 = vmatprep.subr.mxu0 0.0
        %481 = vmatpush1.msra.mxu0 0.0
        %482 = vmatprep.subr.mxu0 0.0
        %483 = vmatpush1.msra.mxu0 0.0
        %484 = vmatprep.subr.mxu0 0.0
        %485 = vmatpush1.msra.mxu0 0.0
        %486 = vmatprep.mubr.f32.mxu0 0.0
        %487 = vmatmul.mubr.f32.gmra.mrb[0].mxu0 %v349
        %v488 = vpop.f32.mrb[0].mxu0
        %v489 = vadd.f32 %v338, %v488
        %v490 = vpop.f32.mrb[0].mxu0
        %v491 = vadd.f32 %v342, %v490
        %492 = vdwg.mxu0
        %v494 = vrot.slane %v420, 7
        %v497 = vrot.slane %v489, 6
        %vm499 = vcmask 1040384
        %v500 = vsel %vm499, %v418, %v494
        %vm501 = vcmask 1041408
        %v502 = vsel %vm501, %v500, %v497
        %v503 = vsub.f32 0.0, %v502
        %v504 = vmul.f32 %v503, 1.442695
        %v505 = vpow.pop %v504
        %v506 = vadd.f32 %v505, 1.0
        %v507 = vrcp.pop %v506
        %v508 = vmax.f32 %v502, 0.0
        %v509 = vand.u32 2147483647, %v502
        %v510 = vsub.f32 0.0, %v509
        %v511 = vmul.f32 %v510, 1.442695
        %v512 = vpow.pop %v511
        %v513 = vadd.f32 %v512, 1.0
        %v514 = vlog2.pop %v513
        %v515 = vmul.f32 %v514, 0.6931472
        %v516 = vadd.f32 %v508, %v515
        %v517 = vadd.f32 %v516, 1.0
        %vm518 = vcmask 100432
        %v519 = vsel %vm518, %v502, -inf
        %520 = vmax.xlane.f32.xlu0 %v519
        %v521 = vpop.xlane.xlu0 %520
        %v522 = vsub.f32 %v502, %v521
        %v523 = vmul.f32 %v522, 1.442695
        %v524 = vpow.pop %v523
        %526 = vrot.lane.b32.xlu0 %v524, 118
        %v527 = vpop.permute.xlu0 %526
        %vm529 = vcmask 18432
        %v530 = vsel %vm529, %v527, 0.0
        %531 = vadd.xlane.f32.xlu0 %v530
        %v532 = vpop.xlane.xlu0 %531
        %v533 = vrcp.pop %v532
        %v534 = vmul.f32 %v524, %v533
        %v535 = vmul.f32 %v307, %v307
        %v536 = vrot.slane %v535, 4
        %v537 = vadd.f32 %v535, %v536
        %v538 = vrot.slane %v537, 2
        %v539 = vadd.f32 %v537, %v538
        %v540 = vrot.slane %v539, 1
        %v541 = vadd.f32 %v539, %v540
        %v542 = vmax.f32 %v541, 1e-24
        %v543 = vrsqrt.pop %v542
        %v544 = vmul.f32 %v507, %v507
        %vm545 = vcmask 59392
        %v546 = vsel %vm545, %v544, 0.0
        %547 = vadd.xlane.f32.xlu0 %v546
        %v548 = vpop.xlane.xlu0 %547
        %v549 = vmax.f32 %v548, 1e-24
        %v550 = vrsqrt.pop %v549
        %vm551 = vcmask 64512
        %v553 = vsel %vm551, %v507, 0
        %555 = vmatprep.subr.mxu0 0.0
        %556 = vmatpush1.msra.mxu0 %v307
        %557 = vmatprep.subr.mxu0 0.0
        %558 = vmatpush1.msra.mxu0 0.0
        %559 = vmatprep.subr.mxu0 0.0
        %560 = vmatpush1.msra.mxu0 0.0
        %561 = vmatprep.subr.mxu0 0.0
        %562 = vmatpush1.msra.mxu0 0.0
        %563 = vmatprep.subr.mxu0 0.0
        %564 = vmatpush1.msra.mxu0 0.0
        %565 = vmatprep.subr.mxu0 0.0
        %566 = vmatpush1.msra.mxu0 0.0
        %567 = vmatprep.subr.mxu0 0.0
        %568 = vmatpush1.msra.mxu0 0.0
        %569 = vmatprep.subr.mxu0 0.0
        %570 = vmatpush1.msra.mxu0 0.0
        %571 = vmatprep.subr.mxu0 0.0
        %572 = vmatpush1.msra.mxu0 0.0
        %573 = vmatprep.subr.mxu0 0.0
        %574 = vmatpush1.msra.mxu0 0.0
        %575 = vmatprep.subr.mxu0 0.0
        %576 = vmatpush1.msra.mxu0 0.0
        %577 = vmatprep.subr.mxu0 0.0
        %578 = vmatpush1.msra.mxu0 0.0
        %579 = vmatprep.subr.mxu0 0.0
        %580 = vmatpush1.msra.mxu0 0.0
        %581 = vmatprep.subr.mxu0 0.0
        %582 = vmatpush1.msra.mxu0 0.0
        %583 = vmatprep.subr.mxu0 0.0
        %584 = vmatpush1.msra.mxu0 0.0
        %585 = vmatprep.subr.mxu0 0.0
        %586 = vmatpush1.msra.mxu0 0.0
        %587 = vmatprep.subr.mxu0 0.0
        %588 = vmatpush1.msra.mxu0 0.0
        %589 = vmatprep.subr.mxu0 0.0
        %590 = vmatpush1.msra.mxu0 0.0
        %591 = vmatprep.subr.mxu0 0.0
        %592 = vmatpush1.msra.mxu0 0.0
        %593 = vmatprep.subr.mxu0 0.0
        %594 = vmatpush1.msra.mxu0 0.0
        %595 = vmatprep.subr.mxu0 0.0
        %596 = vmatpush1.msra.mxu0 0.0
        %597 = vmatprep.subr.mxu0 0.0
        %598 = vmatpush1.msra.mxu0 0.0
        %599 = vmatprep.subr.mxu0 0.0
        %600 = vmatpush1.msra.mxu0 0.0
        %601 = vmatprep.subr.mxu0 0.0
        %602 = vmatpush1.msra.mxu0 0.0
        %603 = vmatprep.subr.mxu0 0.0
        %604 = vmatpush1.msra.mxu0 0.0
        %605 = vmatprep.subr.mxu0 0.0
        %606 = vmatpush1.msra.mxu0 0.0
        %607 = vmatprep.subr.mxu0 0.0
        %608 = vmatpush1.msra.mxu0 0.0
        %609 = vmatprep.subr.mxu0 0.0
        %610 = vmatpush1.msra.mxu0 0.0
        %611 = vmatprep.subr.mxu0 0.0
        %612 = vmatpush1.msra.mxu0 0.0
        %613 = vmatprep.subr.mxu0 0.0
        %614 = vmatpush1.msra.mxu0 0.0
        %615 = vmatprep.subr.mxu0 0.0
        %616 = vmatpush1.msra.mxu0 0.0
        %617 = vmatprep.subr.mxu0 0.0
        %618 = vmatpush1.msra.mxu0 0.0
        %619 = vmatprep.mubr.f32.mxu0 0.0
        %620 = vmatmul.mubr.f32.gmra.mrb[0].mxu0 %v553
        %v621 = vpop.f32.mrb[0].mxu0
        %v622 = vadd.f32 0.0, %v621
        %v623 = vpop.f32.mrb[0].mxu0
        %624 = vdwg.mxu0
        %v625 = vmul.f32 %v550, %v517
        %627 = vset.pattern.permute.xlu0 8
        %628 = vperm.xlu0 %627, %v625
        %v629 = vpop.permute.xlu0 %628
        %v631 = vmul.f32 %v622, %v629
        %v632 = vmul.f32 %v631, %v543
        %vm633 = vcmask 1042432
        %v634 = vsel %vm633, %v632, -inf
        %635 = vmax.xlane.f32.xlu0 %v634
        %v636 = vpop.xlane.xlu0 %635
        %v637 = vsub.f32 %v632, %v636
        %v638 = vmul.f32 %v637, 1.442695
        %v639 = vpow.pop %v638
        %v640 = vsel %vm633, %v639, 0.0
        %641 = vadd.xlane.f32.xlu0 %v640
        %v642 = vpop.xlane.xlu0 %641
        %v643 = vrcp.pop %v642
        %v644 = vmul.f32 %v639, %v643
        %645 = vset.pattern.permute.xlu0 9
        %646 = vperm.xlu0 %645, %v507
        %v647 = vpop.permute.xlu0 %646
        %v649 = vmul.f32 %v647, %v644
        %v650 = vsub.f32 1.0, %v507
        %652 = vset.pattern.permute.xlu0 9
        %653 = vperm.xlu0 %652, %v650
        %v654 = vpop.permute.xlu0 %653
        %v656 = vmul.f32 %v654, %v308
        %v657 = vadd.f32 %v649, %v656
        %659 = vset.pattern.permute.xlu0 11
        %660 = vperm.xlu0 %659, %v534
        %v661 = vpop.permute.xlu0 %660
        %v663 = vmul.f32 %v661, %v657
        %664 = vrot.lane.b32.xlu0 %v657, 1
        %v665 = vpop.permute.xlu0 %664
        %666 = vset.pattern.permute.xlu0 10
        %667 = vperm.xlu0 %666, %v534
        %v668 = vpop.permute.xlu0 %667
        %v670 = vmul.f32 %v668, %v665
        %v671 = vadd.f32 %v663, %v670
        %672 = vrot.lane.b32.xlu0 %v657, 127
        %v673 = vpop.permute.xlu0 %672
        %674 = vset.pattern.permute.xlu0 12
        %675 = vperm.xlu0 %674, %v534
        %v676 = vpop.permute.xlu0 %675
        %v678 = vmul.f32 %v676, %v673
        %v679 = vadd.f32 %v671, %v678
        %v680 = vadd.f32 %v679, 1e-12
        %v681 = vlog2.pop %v680
        %v682 = vmul.f32 %v681, 0.6931472
        %684 = vset.pattern.permute.xlu0 13
        %685 = vperm.xlu0 %684, %v517
        %v686 = vpop.permute.xlu0 %685
        %v688 = vmul.f32 %v686, %v682
        %v689 = vmul.f32 %v688, 1.442695
        %v690 = vpow.pop %v689
        %v691 = vsel %vm633, %v690, 0.0
        %692 = vadd.xlane.f32.xlu0 %v691
        %v693 = vpop.xlane.xlu0 %692
        %v694 = vmax.f32 %v693, 1e-12
        %v695 = vrcp.pop %v694
        %v696 = vmul.f32 %v690, %v695
        %697 = vmatprep.subr.mxu0 0.0
        %698 = vmatpush1.xpose.msra.mxu0 %v307
        %699 = vmatprep.subr.mxu0 0.0
        %700 = vmatpush1.xpose.msra.mxu0 0.0
        %701 = vmatprep.subr.mxu0 0.0
        %702 = vmatpush1.xpose.msra.mxu0 0.0
        %703 = vmatprep.subr.mxu0 0.0
        %704 = vmatpush1.xpose.msra.mxu0 0.0
        %705 = vmatprep.subr.mxu0 0.0
        %706 = vmatpush1.xpose.msra.mxu0 0.0
        %707 = vmatprep.subr.mxu0 0.0
        %708 = vmatpush1.xpose.msra.mxu0 0.0
        %709 = vmatprep.subr.mxu0 0.0
        %710 = vmatpush1.xpose.msra.mxu0 0.0
        %711 = vmatprep.subr.mxu0 0.0
        %712 = vmatpush1.xpose.msra.mxu0 0.0
        %713 = vmatprep.subr.mxu0 0.0
        %714 = vmatpush1.xpose.msra.mxu0 0.0
        %715 = vmatprep.subr.mxu0 0.0
        %716 = vmatpush1.xpose.msra.mxu0 0.0
        %717 = vmatprep.subr.mxu0 0.0
        %718 = vmatpush1.xpose.msra.mxu0 0.0
        %719 = vmatprep.subr.mxu0 0.0
        %720 = vmatpush1.xpose.msra.mxu0 0.0
        %721 = vmatprep.subr.mxu0 0.0
        %722 = vmatpush1.xpose.msra.mxu0 0.0
        %723 = vmatprep.subr.mxu0 0.0
        %724 = vmatpush1.xpose.msra.mxu0 0.0
        %725 = vmatprep.subr.mxu0 0.0
        %726 = vmatpush1.xpose.msra.mxu0 0.0
        %727 = vmatprep.subr.mxu0 0.0
        %728 = vmatpush1.xpose.msra.mxu0 0.0
        %729 = vmatprep.subr.mxu0 0.0
        %730 = vmatpush1.xpose.msra.mxu0 0.0
        %731 = vmatprep.subr.mxu0 0.0
        %732 = vmatpush1.xpose.msra.mxu0 0.0
        %733 = vmatprep.subr.mxu0 0.0
        %734 = vmatpush1.xpose.msra.mxu0 0.0
        %735 = vmatprep.subr.mxu0 0.0
        %736 = vmatpush1.xpose.msra.mxu0 0.0
        %737 = vmatprep.subr.mxu0 0.0
        %738 = vmatpush1.xpose.msra.mxu0 0.0
        %739 = vmatprep.subr.mxu0 0.0
        %740 = vmatpush1.xpose.msra.mxu0 0.0
        %741 = vmatprep.subr.mxu0 0.0
        %742 = vmatpush1.xpose.msra.mxu0 0.0
        %743 = vmatprep.subr.mxu0 0.0
        %744 = vmatpush1.xpose.msra.mxu0 0.0
        %745 = vmatprep.subr.mxu0 0.0
        %746 = vmatpush1.xpose.msra.mxu0 0.0
        %747 = vmatprep.subr.mxu0 0.0
        %748 = vmatpush1.xpose.msra.mxu0 0.0
        %749 = vmatprep.subr.mxu0 0.0
        %750 = vmatpush1.xpose.msra.mxu0 0.0
        %751 = vmatprep.subr.mxu0 0.0
        %752 = vmatpush1.xpose.msra.mxu0 0.0
        %753 = vmatprep.subr.mxu0 0.0
        %754 = vmatpush1.xpose.msra.mxu0 0.0
        %755 = vmatprep.subr.mxu0 0.0
        %756 = vmatpush1.xpose.msra.mxu0 0.0
        %757 = vmatprep.subr.mxu0 0.0
        %758 = vmatpush1.xpose.msra.mxu0 0.0
        %759 = vmatprep.subr.mxu0 0.0
        %760 = vmatpush1.xpose.msra.mxu0 0.0
        %761 = vmatprep.mubr.f32.mxu0 0.0
        %762 = vmatmul.mubr.f32.gmra.mrb[0].mxu0 %v696
        %v763 = vpop.f32.mrb[0].mxu0
        %v764 = vadd.f32 0.0, %v763
        %v765 = vpop.f32.mrb[0].mxu0
        %766 = vdwg.mxu0
        %v767 = vsub.f32 0.0, %v491
        %v768 = vmul.f32 %v767, 1.442695
        %v769 = vpow.pop %v768
        %v770 = vadd.f32 %v769, 1.0
        %v771 = vrcp.pop %v770
        %v772 = vmul.f32 1.0, %v771
        %v773 = vlaneseq
        %v774 = vshrl.u32 %v773, 7
        %v775 = vsub.s32 0, %v774
        %v776 = vrot.slane %v772, %v775
        %778 = vbcast.lane.b32.xlu0 %v776, 256
        %v779 = vpop.permute.xlu0 %778
        %s781 = sor.u32 256, 8
        %782 = vbcast.lane.b32.xlu0 %v776, %s781
        %v783 = vpop.permute.xlu0 %782
        %v784 = vlaneseq
        %v785 = vshrl.u32 %v784, 7
        %v786 = vsub.s32 2, %v785
        %v787 = vrot.slane %v696, %v786
        %v788 = vmul.f32 %v779, %v787
        %v789 = vsub.f32 1.0, %v788
        %v790 = vmul.f32 %v307, %v789
        %v791 = vmul.f32 %v783, %v787
        %v792 = vadd.f32 %v790, %v791
        %793 = vst [vmem:[%s300] sm:$0xff] %v792
        %794 = vst [vmem:[%s305] sm:$0x7] %v696
        %795 = vst [vmem:[%s305 + $0x4] sm:$0x7] %v644
        %796 = vst.msk [vmem:[%s305 + $0x8] sm:$0x7] %vm545, %v764
        %797 = vrot.lane.b32.xlu0 %v507, 127
        %v798 = vpop.permute.xlu0 %797
        %vm800 = vcmask 67648
        %801 = vst.msk [vmem:[%s305 + $0x8] sm:$0x7] %vm800, %v798
        %802 = vrot.lane.b32.xlu0 %v534, 127
        %v803 = vpop.permute.xlu0 %802
        %vm805 = vcmask 92232
        %806 = vst.msk [vmem:[%s305 + $0x8] sm:$0x7] %vm805, %v803
        %p807 = scmp.lt.s32.totalorder %s19, 1
        %s808 = scalar_select %p807, %s19, 1
        %s809 = smul.addr %s808, 8
        %s810 = scalar_lea.vmem %s5, %s809
        %p811 = scmp.lt.s32.totalorder %s19, 1
        %s812 = scalar_select %p811, %s19, 1
        %s813 = smul.addr %s812, 3
        %s814 = smul.addr %s813, 4
        %s815 = scalar_lea.vmem %s6, %s814
        // Predicated region
        $region45: #{tpu_custom_call.1} parent=39 // pred_check
          %p816 = pneg %p157
        $region46: #{tpu_custom_call.1} parent=39 // pred_check_branch
          %818 = sbr.rel (%p816) target = $region48
        $region47: #{tpu_custom_call.1} parent=39 // pred_region
          _
        $region48: #{tpu_custom_call.1} parent=39 // pred_fallthru
          _
        // Predicated region
        $region49: #{tpu_custom_call.1} parent=39 // pred_check
          %p819 = pneg %p183
        $region50: #{tpu_custom_call.1} parent=39 // pred_check_branch
          %821 = sbr.rel (%p819) target = $region52
        $region51: #{tpu_custom_call.1} parent=39 // pred_region
          _
        $region52: #{tpu_custom_call.1} parent=39 // pred_fallthru
          _
      $region40: #{tpu_custom_call.1} parent=5 // pred_fallthru
        _
      %p822 = scmp.le.s32.totalorder 2, %s14
      // Predicated region
      $region53: #{tpu_custom_call.1} parent=5 // pred_check
        %p823 = pneg %p822
      $region54: #{tpu_custom_call.1} parent=5 // pred_check_branch
        %825 = sbr.rel (%p823) target = $region56
      $region55: #{tpu_custom_call.1} parent=5 // pred_region
        %s826 = ssub.s32 %s14, 2
        // Predicated region
        $region57: #{tpu_custom_call.1} parent=55 // pred_check
          %p827 = pneg %p163
        $region58: #{tpu_custom_call.1} parent=55 // pred_check_branch
          %829 = sbr.rel (%p827) target = $region60
        $region59: #{tpu_custom_call.1} parent=55 // pred_region
          %p830 = scmp.lt.s32.totalorder %s20, 1
          %s831 = scalar_select %p830, %s20, 1
          %s832 = smul.addr %s831, 8
          %s833 = scalar_lea.vmem %s5, %s832
        $region60: #{tpu_custom_call.1} parent=55 // pred_fallthru
          _
        // Predicated region
        $region61: #{tpu_custom_call.1} parent=55 // pred_check
          %p834 = pneg %p189
        $region62: #{tpu_custom_call.1} parent=55 // pred_check_branch
          %836 = sbr.rel (%p834) target = $region64
        $region63: #{tpu_custom_call.1} parent=55 // pred_region
          %p837 = scmp.lt.s32.totalorder %s20, 1
          %s838 = scalar_select %p837, %s20, 1
          %s839 = smul.addr %s838, 3
          %s840 = smul.addr %s839, 4
          %s841 = scalar_lea.vmem %s6, %s840
        $region64: #{tpu_custom_call.1} parent=55 // pred_fallthru
          _
      $region56: #{tpu_custom_call.1} parent=5 // pred_fallthru
        _
    $region6: #{tpu_custom_call.1} parent=1 // loop_footer
      %s18 = sadd.s32 1, %s14
    $region7: #{tpu_custom_call.1} parent=1 // loop_footer_branch
      %13 = sbr.rel target = $region3
    $region8: #{tpu_custom_call.1} parent=1 // loop_exit
      _
    %842 = vsyncpa [#allocation3], 1
    %s843 = scalar_lea.sflag [#allocation3], 1
    %844 = vsyncpa %s843, 1

</llo_original>
